<compile_context>
chip_gen: v6e
topology: v6e:2x2x1
jax: 0.10.0
libtpu: 0.0.40
codegen_flags: <defaults>
</compile_context>

<pallas_src>
import functools

import jax
import jax.numpy as jnp
from jax.experimental import pallas as pl
from jax.experimental.pallas import tpu as pltpu

_LANE = 128
_SUBLANE = 8


def _linear_nobias_kernel(x_ref, w_ref, o_ref):
    # (TM, K) @ (K, N_pad) -> (TM, N_pad) on the MXU, f32 accumulation.
    o_ref[...] = jnp.dot(
        x_ref[...], w_ref[...], preferred_element_type=jnp.float32
    ).astype(o_ref.dtype)


def prepare_coxph_weight(weight, dtype=jnp.float32):
    """One-time weight prep (call at parameter-init time, NOT per forward).

    Takes the PyTorch-layout weight (outputSize, inputSize), transposes it to
    (inputSize, N_pad) and zero-pads the output dim up to a multiple of 128 so
    every kernel output store is a full-lane (unmasked) vst.
    """
    out_size, in_size = weight.shape
    n_pad = max(_LANE, ((out_size + _LANE - 1) // _LANE) * _LANE)
    w = jnp.zeros((in_size, n_pad), dtype=dtype)
    w = w.at[:, :out_size].set(weight.T.astype(dtype))
    return w


def _choose_tm(b, k, n_pad, itemsize=4, vmem_budget=24 * 1024 * 1024):
    """Largest batch tile (multiple of 8, <= 512 rows) fitting the VMEM budget."""
    tm = min(512, ((b + _SUBLANE - 1) // _SUBLANE) * _SUBLANE)
    tm = max(_SUBLANE, (tm // _SUBLANE) * _SUBLANE)

    def footprint(t):
        # double-buffered x + double-buffered out + (double-buffered) weight
        return (2 * t * k + 2 * t * n_pad + 2 * k * n_pad) * itemsize

    while tm > _SUBLANE and footprint(tm) > vmem_budget:
        tm = max(_SUBLANE, ((tm // 2) // _SUBLANE) * _SUBLANE)
    return tm


@functools.partial(jax.jit, static_argnames=("out_size",))
def linear_coxph_forward(x, w_prepared, out_size):
    """x: (B, inputSize) f32; w_prepared: output of prepare_coxph_weight."""
    B, K = x.shape
    k_w, n_pad = w_prepared.shape
    assert k_w == K

    itemsize = jnp.dtype(x.dtype).itemsize
    tm = _choose_tm(B, K, n_pad, itemsize=itemsize)
    b_pad = ((B + tm - 1) // tm) * tm
    x_in = x if b_pad == B else jnp.pad(x, ((0, b_pad - B), (0, 0)))
    grid = (b_pad // tm,)

    footprint = (2 * tm * K + 2 * tm * n_pad + 2 * K * n_pad) * itemsize
    vmem_limit = int(
        min(64 * 1024 * 1024, max(16 * 1024 * 1024, footprint + 8 * 1024 * 1024))
    )

    cost = pl.CostEstimate(
        flops=2 * b_pad * K * n_pad,
        transcendentals=0,
        bytes_accessed=(b_pad * K + K * n_pad + b_pad * n_pad) * itemsize,
    )

    out_pad = pl.pallas_call(
        _linear_nobias_kernel,
        out_shape=jax.ShapeDtypeStruct((b_pad, n_pad), x.dtype),
        grid_spec=pl.GridSpec(
            grid=grid,
            in_specs=[
                pl.BlockSpec((tm, K), lambda i: (i, 0)),      # stream x tiles
                pl.BlockSpec((K, n_pad), lambda i: (0, 0)),   # weight VMEM-resident
            ],
            out_specs=pl.BlockSpec((tm, n_pad), lambda i: (i, 0)),
        ),
        compiler_params=pltpu.CompilerParams(
            dimension_semantics=("parallel",),
            vmem_limit_bytes=vmem_limit,
        ),
        cost_estimate=cost,
    )(x_in, w_prepared)

    return out_pad[:B, :out_size]


if __name__ == "__main__":
    key = jax.random.PRNGKey(0)
    k_x, k_w = jax.random.split(key)

    batch = 64
    input_size = 32
    output_size = 16

    # Deterministic synthetic parameters, same shapes as
    # nn.Linear(inputSize, outputSize, bias=False).
    x = jax.random.normal(k_x, (batch, input_size), dtype=jnp.float32)
    weight = jax.random.normal(k_w, (output_size, input_size), dtype=jnp.float32) * 0.1

    # One-time weight preparation (hoisted out of the forward call path).
    w_prep = prepare_coxph_weight(weight)

    out = linear_coxph_forward(x, w_prep, output_size)
    out = jax.block_until_ready(out)

    # Correctness check against plain JAX reference (x @ W.T).
    ref = x @ weight.T
    assert out.shape == (batch, output_size)
    assert jnp.allclose(out, ref, atol=1e-5, rtol=1e-5)

    print("KERNEL_OK")
</pallas_src>

<mosaic_0001>
module attributes {stable_mosaic.version = 11 : i64} {
  func.func @_linear_nobias_kernel(%arg0: i32, %arg1: memref<64x32xf32, #tpu.memory_space<vmem>>, %arg2: memref<32x128xf32, #tpu.memory_space<vmem>>, %arg3: memref<64x128xf32, #tpu.memory_space<vmem>>) attributes {dimension_semantics = [#tpu.dimension_semantics<parallel>], iteration_bounds = array<i64: 1>, scalar_prefetch = 0 : i64, scratch_operands = 0 : i64, tpu.core_type = #tpu.core_type<tc>, window_params = [{transform_indices = @transform_0, window_bounds = array<i64: 64, 32>}, {pipeline_mode = #tpu.pipeline_mode<synchronous>, transform_indices = @transform_1, window_bounds = array<i64: 32, 128>}, {transform_indices = @transform_2, window_bounds = array<i64: 64, 128>}]} {
    %c0 = arith.constant 0 : index
    %c0_0 = arith.constant 0 : index
    %0 = vector.load %arg1[%c0, %c0_0] : memref<64x32xf32, #tpu.memory_space<vmem>>, vector<64x32xf32>
    %c0_1 = arith.constant 0 : index
    %c0_2 = arith.constant 0 : index
    %1 = vector.load %arg2[%c0_1, %c0_2] : memref<32x128xf32, #tpu.memory_space<vmem>>, vector<32x128xf32>
    %cst = arith.constant dense<0.000000e+00> : vector<64x128xf32>
    %2 = tpu.matmul %0, %1, %cst {dimension_numbers = #tpu.dot_dimension_numbers<[1], [0], [0], [1], [0, 0, 1, 1], [], []>} : vector<64x32xf32>, vector<32x128xf32>, vector<64x128xf32> -> vector<64x128xf32>
    %c0_3 = arith.constant 0 : index
    %c0_4 = arith.constant 0 : index
    %3 = vector.load %arg3[%c0_3, %c0_4] : memref<64x128xf32, #tpu.memory_space<vmem>>, vector<64x128xf32>
    tpu.vector_store %arg3[%c0_3, %c0_4], %2 {strides = array<i32>} : memref<64x128xf32, #tpu.memory_space<vmem>>, vector<64x128xf32>,
    return
  }
  func.func @transform_0(%arg0: i32) -> (i32, i32) {
    %c0_i32 = arith.constant 0 : i32
    %c0_i32_0 = arith.constant 0 : i32
    return %arg0, %c0_i32 : i32, i32
  }
  func.func @transform_1(%arg0: i32) -> (i32, i32) {
    %c0_i32 = arith.constant 0 : i32
    %c0_i32_0 = arith.constant 0 : i32
    %c0_i32_1 = arith.constant 0 : i32
    return %c0_i32, %c0_i32_0 : i32, i32
  }
  func.func @transform_2(%arg0: i32) -> (i32, i32) {
    %c0_i32 = arith.constant 0 : i32
    %c0_i32_0 = arith.constant 0 : i32
    return %arg0, %c0_i32 : i32, i32
  }
}

</mosaic_0001>

<llo_original>
// kernel: linear_coxph_forward.1
$region0: #{linear_coxph_forward.1}
  #allocation0 [shape = 'u32[]', space=smem, size = 0x4, offset = 0x4, fixed_abs, tag = 'smem constant byte address 0x4 - core index']
  #allocation1 [shape = 'u32[144,128]{1,0:T(1,128)}', space=vmem, size = 0x12000, scoped, tag = 'internal scratch']
  %s0 = inlined_call_operand.vmem [shape: f32[64,32], index: 0, kind: input, shape index: {}]
  %s1 = inlined_call_operand.vmem [shape: f32[32,128], index: 1, kind: input, shape index: {}]
  %s2 = inlined_call_operand.vmem [shape: f32[64,128], index: 2, kind: output, shape index: {}]
  %s3 = sld [smem:[#allocation0]]
  $region18: #{linear_coxph_forward.1} parent=0
    _
  %s5 = ssub.s32 1, %s3
  %s6 = scalar_select 0, %s5, %s3
  // Predicated region
  $region2: #{linear_coxph_forward.1} parent=0 // pred_check
    _
  $region3: #{linear_coxph_forward.1} parent=0 // pred_check_branch
    %8 = sbr.rel (0) target = $region5
  $region4: #{linear_coxph_forward.1} parent=0 // pred_region
    _
  $region5: #{linear_coxph_forward.1} parent=0 // pred_fallthru
    _
  // Predicated region
  $region6: #{linear_coxph_forward.1} parent=0 // pred_check
    _
  $region7: #{linear_coxph_forward.1} parent=0 // pred_check_branch
    %10 = sbr.rel (0) target = $region9
  $region8: #{linear_coxph_forward.1} parent=0 // pred_region
    _
  $region9: #{linear_coxph_forward.1} parent=0 // pred_fallthru
    _
  %v11 = vld [vmem:[%s0] sm:$0xff]
  %v12 = vld [vmem:[%s0 + $0x8] sm:$0xff]
  %v13 = vld [vmem:[%s0 + $0x10] sm:$0xff]
  %v14 = vld [vmem:[%s0 + $0x18] sm:$0xff]
  %v15 = vld [vmem:[%s0 + $0x20] sm:$0xff]
  %v16 = vld [vmem:[%s0 + $0x28] sm:$0xff]
  %v17 = vld [vmem:[%s0 + $0x30] sm:$0xff]
  %v18 = vld [vmem:[%s0 + $0x38] sm:$0xff]
  %v19 = vld [vmem:[%s1] sm:$0xff]
  %v20 = vld [vmem:[%s1 + $0x8] sm:$0xff]
  %v21 = vld [vmem:[%s1 + $0x10] sm:$0xff]
  %v22 = vld [vmem:[%s1 + $0x18] sm:$0xff]
  %vm23 = vcmask 261120
  %v25 = vsel %vm23, %v11, 0
  %v28 = vsel %vm23, %v12, 0
  %v31 = vsel %vm23, %v13, 0
  %v34 = vsel %vm23, %v14, 0
  %v37 = vsel %vm23, %v15, 0
  %v40 = vsel %vm23, %v16, 0
  %v43 = vsel %vm23, %v17, 0
  %v46 = vsel %vm23, %v18, 0
  %48 = vmatprep.subr.mxu0 0.0
  %49 = vmatpush1.msra.mxu0 0.0
  %50 = vmatprep.subr.mxu0 0.0
  %51 = vmatpush1.msra.mxu0 0.0
  %52 = vmatprep.subr.mxu0 0.0
  %53 = vmatpush1.msra.mxu0 0.0
  %54 = vmatprep.subr.mxu0 0.0
  %55 = vmatpush1.msra.mxu0 0.0
  %56 = vmatprep.subr.mxu0 0.0
  %57 = vmatpush1.msra.mxu0 0.0
  %58 = vmatprep.subr.mxu0 0.0
  %59 = vmatpush1.msra.mxu0 0.0
  %60 = vmatprep.subr.mxu0 0.0
  %61 = vmatpush1.msra.mxu0 0.0
  %62 = vmatprep.subr.mxu0 0.0
  %63 = vmatpush1.msra.mxu0 0.0
  %64 = vmatprep.subr.mxu0 0.0
  %65 = vmatpush1.msra.mxu0 0.0
  %66 = vmatprep.subr.mxu0 0.0
  %67 = vmatpush1.msra.mxu0 0.0
  %68 = vmatprep.subr.mxu0 0.0
  %69 = vmatpush1.msra.mxu0 0.0
  %70 = vmatprep.subr.mxu0 0.0
  %71 = vmatpush1.msra.mxu0 0.0
  %72 = vmatprep.subr.mxu0 0.0
  %73 = vmatpush1.msra.mxu0 %v22
  %74 = vmatprep.subr.mxu0 0.0
  %75 = vmatpush1.msra.mxu0 %v21
  %76 = vmatprep.subr.mxu0 0.0
  %77 = vmatpush1.msra.mxu0 %v20
  %78 = vmatprep.subr.mxu0 0.0
  %79 = vmatpush1.msra.mxu0 %v19
  %80 = vmatprep.subr.mxu0 0.0
  %81 = vmatpush2.msra.mxu0 0.0
  %82 = vmatprep.subr.mxu0 0.0
  %83 = vmatpush2.msra.mxu0 0.0
  %84 = vmatprep.subr.mxu0 0.0
  %85 = vmatpush2.msra.mxu0 0.0
  %86 = vmatprep.subr.mxu0 0.0
  %87 = vmatpush2.msra.mxu0 0.0
  %88 = vmatprep.subr.mxu0 0.0
  %89 = vmatpush2.msra.mxu0 0.0
  %90 = vmatprep.subr.mxu0 0.0
  %91 = vmatpush2.msra.mxu0 0.0
  %92 = vmatprep.subr.mxu0 0.0
  %93 = vmatpush2.msra.mxu0 0.0
  %94 = vmatprep.subr.mxu0 0.0
  %95 = vmatpush2.msra.mxu0 0.0
  %96 = vmatprep.subr.mxu0 0.0
  %97 = vmatpush2.msra.mxu0 0.0
  %98 = vmatprep.subr.mxu0 0.0
  %99 = vmatpush2.msra.mxu0 0.0
  %100 = vmatprep.subr.mxu0 0.0
  %101 = vmatpush2.msra.mxu0 0.0
  %102 = vmatprep.subr.mxu0 0.0
  %103 = vmatpush2.msra.mxu0 0.0
  %104 = vmatprep.subr.mxu0 0.0
  %105 = vmatpush2.msra.mxu0 0.0
  %106 = vmatprep.subr.mxu0 0.0
  %107 = vmatpush2.msra.mxu0 0.0
  %108 = vmatprep.subr.mxu0 0.0
  %109 = vmatpush2.msra.mxu0 0.0
  %110 = vmatprep.subr.mxu0 0.0
  %111 = vmatpush2.msra.mxu0 0.0
  %112 = vmatprep.mubr.f32.mxu0 0.0
  %113 = vmatmul.mubr.f32.gmra.mxu0 %v25
  %v114 = vpop.f32.mrf.mxu0
  %v115 = vadd.f32 0.0, %v114
  %v116 = vpop.f32.mrf.mxu0
  %117 = vmatprep.mubr.f32.mxu0 0.0
  %118 = vmatmul.mubr.f32.gmra.mxu0 %v28
  %v119 = vpop.f32.mrf.mxu0
  %v120 = vadd.f32 0.0, %v119
  %v121 = vpop.f32.mrf.mxu0
  %122 = vmatprep.mubr.f32.mxu0 0.0
  %123 = vmatmul.mubr.f32.gmra.mxu0 %v31
  %v124 = vpop.f32.mrf.mxu0
  %v125 = vadd.f32 0.0, %v124
  %v126 = vpop.f32.mrf.mxu0
  %127 = vmatprep.mubr.f32.mxu0 0.0
  %128 = vmatmul.mubr.f32.gmra.mxu0 %v34
  %v129 = vpop.f32.mrf.mxu0
  %v130 = vadd.f32 0.0, %v129
  %v131 = vpop.f32.mrf.mxu0
  %132 = vmatprep.mubr.f32.mxu0 0.0
  %133 = vmatmul.mubr.f32.gmra.mxu0 %v37
  %v134 = vpop.f32.mrf.mxu0
  %v135 = vadd.f32 0.0, %v134
  %v136 = vpop.f32.mrf.mxu0
  %137 = vmatprep.mubr.f32.mxu0 0.0
  %138 = vmatmul.mubr.f32.gmra.mxu0 %v40
  %v139 = vpop.f32.mrf.mxu0
  %v140 = vadd.f32 0.0, %v139
  %v141 = vpop.f32.mrf.mxu0
  %142 = vmatprep.mubr.f32.mxu0 0.0
  %143 = vmatmul.mubr.f32.gmra.mxu0 %v43
  %v144 = vpop.f32.mrf.mxu0
  %v145 = vadd.f32 0.0, %v144
  %v146 = vpop.f32.mrf.mxu0
  %147 = vmatprep.mubr.f32.mxu0 0.0
  %148 = vmatmul.mubr.f32.gmra.mxu0 %v46
  %v149 = vpop.f32.mrf.mxu0
  %v150 = vadd.f32 0.0, %v149
  %v151 = vpop.f32.mrf.mxu0
  %152 = vdwg.mxu0
  %153 = vst [vmem:[%s2] sm:$0xff] %v115
  %154 = vst [vmem:[%s2 + $0x8] sm:$0xff] %v120
  %155 = vst [vmem:[%s2 + $0x10] sm:$0xff] %v125
  %156 = vst [vmem:[%s2 + $0x18] sm:$0xff] %v130
  %157 = vst [vmem:[%s2 + $0x20] sm:$0xff] %v135
  %158 = vst [vmem:[%s2 + $0x28] sm:$0xff] %v140
  %159 = vst [vmem:[%s2 + $0x30] sm:$0xff] %v145
  %160 = vst [vmem:[%s2 + $0x38] sm:$0xff] %v150
  // Predicated region
  $region10: #{linear_coxph_forward.1} parent=0 // pred_check
    _
  $region11: #{linear_coxph_forward.1} parent=0 // pred_check_branch
    %162 = sbr.rel (0) target = $region13
  $region12: #{linear_coxph_forward.1} parent=0 // pred_region
    _
  $region13: #{linear_coxph_forward.1} parent=0 // pred_fallthru
    _
  // Predicated region
  $region14: #{linear_coxph_forward.1} parent=0 // pred_check
    _
  $region15: #{linear_coxph_forward.1} parent=0 // pred_check_branch
    %164 = sbr.rel (0) target = $region17
  $region16: #{linear_coxph_forward.1} parent=0 // pred_region
    _
  $region17: #{linear_coxph_forward.1} parent=0 // pred_fallthru
    _

</llo_original>
